<compile_context>
chip_gen: v5e
topology: v5e:2x2
jax: 0.10.0
libtpu: 0.0.40
codegen_flags: <defaults>
</compile_context>

<pallas_src>
import numpy as np
import jax
import jax.numpy as jnp
from jax import lax
from jax.experimental import pallas as pl
from jax.experimental.pallas import tpu as pltpu


def _sobel_kernels(normalized: bool = True):
    # get_spatial_gradient_kernel2d('sobel', 1): stack([kx, ky]) with
    # kx = [[-1,0,1],[-2,0,2],[-1,0,1]], ky = kx.T; normalize divides by abs-sum (=8).
    kx = np.array([[-1.0, 0.0, 1.0],
                   [-2.0, 0.0, 2.0],
                   [-1.0, 0.0, 1.0]], dtype=np.float32)
    ky = kx.T.copy()
    if normalized:
        kx = kx / np.abs(kx).sum()
        ky = ky / np.abs(ky).sum()
    return kx, ky


def _vmem_limit_bytes() -> int:
    """Scoped-VMEM limit ~= 75% of physical: ~48 MiB on v7x (64 MiB VMEM),
    ~96 MiB on v5e/v6e (128 MiB).  Falls back to the conservative v7x number."""
    cap = 64 * 1024 * 1024
    try:
        info = pltpu.get_tpu_info()
        cap = int(getattr(info, "vmem_capacity_bytes", cap)) or cap
    except Exception:
        pass
    return (cap // 4) * 3


def _pick_nimg(n_img: int, hwp: int, vmem_limit: int) -> int:
    """Images per grid step.

    The kernel is HBM-bound (~12 B/element), so aim for ~1-2 MiB of f32 input per
    block (measured pipeline efficiency climbs to ~90%+ there), capped so the live
    working set -- roughly 2x(in, double-buffered) + 4x(in, for the 2*HW output,
    double-buffered) + ~8x(in) of elementwise temps ~= 14x the input block --
    stays inside the per-generation VMEM limit.  Whenever there is enough total
    work (>= ~4 MiB of input), keep >= 4 grid steps so double-buffering has
    something to overlap and v7x's two TensorCores both get grid iterations.
    """
    per_img = hwp * 4                                # f32 bytes per flattened image
    max_in_block = max(1 << 20, vmem_limit // 16)    # ~14x working set + margin
    target_in_block = min(2 << 20, max_in_block)     # 1-2 MiB sweet spot
    nimg = max(1, target_in_block // per_img)

    min_steps = 4
    if n_img * per_img >= (min_steps << 20):         # enough total work to split
        nimg = min(nimg, max(1, n_img // min_steps))

    # Legalize the sublane (second-minor) block dim: multiple of 8, or the full axis.
    nimg = min(nimg, n_img)
    if nimg != n_img:
        nimg = max(8, (nimg // 8) * 8)
        if nimg >= n_img:
            nimg = n_img
    # TODO(synk): for single images bigger than the VMEM budget (e.g. 4K frames on
    # v7x) switch to H-row tiling with a 1-row halo instead of whole-image blocks.
    return nimg


def _make_kernel(W: int, HWp: int, scale: float):
    def shift(a, k):
        # result[p] = a[p + k] for interior p; wrap values at the ends are fixed up
        # by the caller's edge masks (np.roll(a, -k)[p] == a[p + k]).
        return pltpu.roll(a, (-k) % HWp, axis=1)     # XLU rotate, always lane-dense

    def kernel(code_ref, x_ref, o_ref):
        # code_ref: (1, HWp) int32 edge bitmask: 1=left col, 2=right col,
        #           4=top row, 8=bottom row (lane-pad positions carry code 0).
        # x_ref   : (nimg, HWp)    spatially-flattened, lane-padded images
        # o_ref   : (nimg, 2*HWp)  -> [grad_x | grad_y] per image
        x = x_ref[...].astype(jnp.float32)
        code = code_ref[...]
        left = (code & 1) != 0
        right = (code & 2) != 0
        # top/bot are each consumed twice; hoist their broadcast once
        # (JAX does not CSE broadcast_in_dim).
        top = jnp.broadcast_to((code & 4) != 0, x.shape)
        bot = jnp.broadcast_to((code & 8) != 0, x.shape)

        # Horizontal pass: +-1 lane shifts with replicate clamp at row ends.
        x_r = jnp.where(right, x, shift(x, 1))       # x[i, min(j+1, W-1)]
        x_l = jnp.where(left, x, shift(x, -1))       # x[i, max(j-1, 0)]
        h_smooth = x_l + 2.0 * x + x_r
        h_diff = x_r - x_l

        # grad_y first (smooth branch), fully stored before the diff branch so the
        # two sets of vertical temps are never simultaneously live (v5e vst slot).
        hs_up = jnp.where(top, h_smooth, shift(h_smooth, -W))
        hs_dn = jnp.where(bot, h_smooth, shift(h_smooth, W))
        gy = hs_dn - hs_up
        if scale != 1.0:
            gy = gy * scale
        o_ref[:, HWp:] = gy.astype(o_ref.dtype)

        # grad_x (diff branch): vertical smooth of the horizontal difference.
        hd_up = jnp.where(top, h_diff, shift(h_diff, -W))
        hd_dn = jnp.where(bot, h_diff, shift(h_diff, W))
        gx = hd_up + 2.0 * h_diff + hd_dn
        if scale != 1.0:
            gx = gx * scale
        o_ref[:, :HWp] = gx.astype(o_ref.dtype)

    return kernel


def spatial_gradient(x: jax.Array, normalized: bool = True, *, _nimg=None) -> jax.Array:
    """x: (B, C, H, W) -> (B, C, 2, H, W); Sobel grad_x / grad_y (cross-correlation,
    replicate padding), matching kornia.filters.SpatialGradient(order=1)."""
    B, C, H, W = x.shape
    N, HW = B * C, H * W
    HWp = ((HW + 127) // 128) * 128                  # lane-dense flattened width
    scale = (1.0 / 8.0) if normalized else 1.0

    xf = x.reshape(N, HW)                            # contiguous reinterpretation, free
    if HWp != HW:
        # Pad lanes are never read unmasked by real outputs (edge masks clamp the
        # image borders); zero padding only keeps rolls/stores lane-dense.
        xf = jnp.pad(xf, ((0, 0), (0, HWp - HW)))

    # Tiny precomputed per-pixel edge-code row (avoids in-kernel vector mod/div).
    jj = np.arange(HW) % W
    ii = np.arange(HW) // W
    code_hw = ((jj == 0).astype(np.int32)
               | ((jj == W - 1).astype(np.int32) << 1)
               | ((ii == 0).astype(np.int32) << 2)
               | ((ii == H - 1).astype(np.int32) << 3))
    code_np = np.zeros((1, HWp), dtype=np.int32)
    code_np[0, :HW] = code_hw
    code = jnp.asarray(code_np)

    vmem_limit = _vmem_limit_bytes()
    nimg = _nimg if _nimg is not None else _pick_nimg(N, HWp, vmem_limit)
    grid = (pl.cdiv(N, nimg),)

    out = pl.pallas_call(
        _make_kernel(W, HWp, scale),
        out_shape=jax.ShapeDtypeStruct((N, 2 * HWp), x.dtype),
        grid=grid,
        in_specs=[
            pl.BlockSpec((1, HWp), lambda i: (0, 0)),      # edge code (stays resident)
            pl.BlockSpec((nimg, HWp), lambda i: (i, 0)),   # image batch tile
        ],
        out_specs=pl.BlockSpec((nimg, 2 * HWp), lambda i: (i, 0)),
        compiler_params=pltpu.CompilerParams(
            dimension_semantics=("parallel",),
            vmem_limit_bytes=vmem_limit,
        ),
    )(code, xf)

    if HWp != HW:
        out = out.reshape(N, 2, HWp)[:, :, :HW]
    return out.reshape(B, C, 2, H, W)


def _reference(x: jax.Array, normalized: bool = True) -> jax.Array:
    """Independent reference via lax.conv (cross-correlation), mirrors the F.conv3d path."""
    B, C, H, W = x.shape
    kx, ky = _sobel_kernels(normalized)
    w = jnp.stack([jnp.asarray(kx), jnp.asarray(ky)])[:, None, :, :]  # (2,1,3,3) OIHW
    xp = jnp.pad(x.reshape(B * C, 1, H, W), ((0, 0), (0, 0), (1, 1), (1, 1)), mode="edge")
    out = lax.conv_general_dilated(
        xp.astype(jnp.float32), w.astype(jnp.float32),
        window_strides=(1, 1), padding="VALID",
        dimension_numbers=("NCHW", "OIHW", "NCHW"),
    )
    return out.reshape(B, C, 2, H, W).astype(x.dtype)


if __name__ == "__main__":
    key = jax.random.PRNGKey(0)

    # Primary case: lane-dense path (HW % 128 == 0), whole batch in one block.
    B, C, H, W = 2, 4, 16, 16
    x = jax.random.uniform(key, (B, C, H, W), dtype=jnp.float32)
    out = jax.block_until_ready(spatial_gradient(x, normalized=True))
    assert out.shape == (B, C, 2, H, W), out.shape
    ref = jax.block_until_ready(_reference(x, normalized=True))
    np.testing.assert_allclose(np.asarray(out), np.asarray(ref), rtol=1e-5, atol=1e-5)

    # Review coverage: HW % 128 != 0 (lane-padded path) plus a ragged tail block
    # (B*C = 10 with an 8-image block -> grid of 2, partial last block).
    x2 = jax.random.uniform(jax.random.PRNGKey(0), (5, 2, 12, 20), dtype=jnp.float32)
    out2 = jax.block_until_ready(spatial_gradient(x2, normalized=True, _nimg=8))
    ref2 = jax.block_until_ready(_reference(x2, normalized=True))
    np.testing.assert_allclose(np.asarray(out2), np.asarray(ref2), rtol=1e-5, atol=1e-5)

    print("KERNEL_OK")
</pallas_src>

<mosaic_0001>
module attributes {stable_mosaic.version = 11 : i64} {
  func.func @kernel(%arg0: i32, %arg1: memref<1x256xi32, #tpu.memory_space<vmem>>, %arg2: memref<8x256xf32, #tpu.memory_space<vmem>>, %arg3: memref<8x512xf32, #tpu.memory_space<vmem>>) attributes {dimension_semantics = [#tpu.dimension_semantics<parallel>], iteration_bounds = array<i64: 1>, scalar_prefetch = 0 : i64, scratch_operands = 0 : i64, tpu.core_type = #tpu.core_type<tc>, window_params = [{pipeline_mode = #tpu.pipeline_mode<synchronous>, transform_indices = @transform_0, window_bounds = array<i64: 1, 256>}, {transform_indices = @transform_1, window_bounds = array<i64: 8, 256>}, {transform_indices = @transform_2, window_bounds = array<i64: 8, 512>}]} {
    %c0 = arith.constant 0 : index
    %c0_0 = arith.constant 0 : index
    %0 = vector.load %arg2[%c0, %c0_0] : memref<8x256xf32, #tpu.memory_space<vmem>>, vector<8x256xf32>
    %c0_1 = arith.constant 0 : index
    %c0_2 = arith.constant 0 : index
    %1 = vector.load %arg1[%c0_1, %c0_2] : memref<1x256xi32, #tpu.memory_space<vmem>>, vector<1x256xi32>
    %c1_i32 = arith.constant 1 : i32
    %2 = vector.broadcast %c1_i32 : i32 to vector<1x256xi32>
    %3 = arith.andi %1, %2 : vector<1x256xi32>
    %c0_i32 = arith.constant 0 : i32
    %4 = vector.broadcast %c0_i32 : i32 to vector<1x256xi32>
    %5 = arith.cmpi ne, %3, %4 : vector<1x256xi32>
    %c2_i32 = arith.constant 2 : i32
    %6 = vector.broadcast %c2_i32 : i32 to vector<1x256xi32>
    %7 = arith.andi %1, %6 : vector<1x256xi32>
    %c0_i32_3 = arith.constant 0 : i32
    %8 = vector.broadcast %c0_i32_3 : i32 to vector<1x256xi32>
    %9 = arith.cmpi ne, %7, %8 : vector<1x256xi32>
    %c4_i32 = arith.constant 4 : i32
    %10 = vector.broadcast %c4_i32 : i32 to vector<1x256xi32>
    %11 = arith.andi %1, %10 : vector<1x256xi32>
    %c0_i32_4 = arith.constant 0 : i32
    %12 = vector.broadcast %c0_i32_4 : i32 to vector<1x256xi32>
    %13 = arith.cmpi ne, %11, %12 : vector<1x256xi32>
    %14 = vector.shape_cast %13 : vector<1x256xi1> to vector<1x256xi1>
    %15 = vector.broadcast %14 : vector<1x256xi1> to vector<8x256xi1>
    %c8_i32 = arith.constant 8 : i32
    %16 = vector.broadcast %c8_i32 : i32 to vector<1x256xi32>
    %17 = arith.andi %1, %16 : vector<1x256xi32>
    %c0_i32_5 = arith.constant 0 : i32
    %18 = vector.broadcast %c0_i32_5 : i32 to vector<1x256xi32>
    %19 = arith.cmpi ne, %17, %18 : vector<1x256xi32>
    %20 = vector.shape_cast %19 : vector<1x256xi1> to vector<1x256xi1>
    %21 = vector.broadcast %20 : vector<1x256xi1> to vector<8x256xi1>
    %c255_i32 = arith.constant 255 : i32
    %22 = tpu.dynamic_rotate %0 by %c255_i32 dim 1 : vector<8x256xf32>, i32 -> vector<8x256xf32>
    %23 = vector.shape_cast %9 : vector<1x256xi1> to vector<1x256xi1>
    %24 = vector.broadcast %23 : vector<1x256xi1> to vector<8x256xi1>
    %25 = arith.select %24, %0, %22 : vector<8x256xi1>, vector<8x256xf32>
    %c1_i32_6 = arith.constant 1 : i32
    %26 = tpu.dynamic_rotate %0 by %c1_i32_6 dim 1 : vector<8x256xf32>, i32 -> vector<8x256xf32>
    %27 = vector.shape_cast %5 : vector<1x256xi1> to vector<1x256xi1>
    %28 = vector.broadcast %27 : vector<1x256xi1> to vector<8x256xi1>
    %29 = arith.select %28, %0, %26 : vector<8x256xi1>, vector<8x256xf32>
    %cst = arith.constant 2.000000e+00 : f32
    %30 = vector.broadcast %cst : f32 to vector<8x256xf32>
    %31 = arith.mulf %30, %0 : vector<8x256xf32>
    %32 = arith.addf %29, %31 : vector<8x256xf32>
    %33 = arith.addf %32, %25 : vector<8x256xf32>
    %34 = arith.subf %25, %29 : vector<8x256xf32>
    %c16_i32 = arith.constant 16 : i32
    %35 = tpu.dynamic_rotate %33 by %c16_i32 dim 1 : vector<8x256xf32>, i32 -> vector<8x256xf32>
    %36 = arith.select %15, %33, %35 : vector<8x256xi1>, vector<8x256xf32>
    %c240_i32 = arith.constant 240 : i32
    %37 = tpu.dynamic_rotate %33 by %c240_i32 dim 1 : vector<8x256xf32>, i32 -> vector<8x256xf32>
    %38 = arith.select %21, %33, %37 : vector<8x256xi1>, vector<8x256xf32>
    %39 = arith.subf %38, %36 : vector<8x256xf32>
    %cst_7 = arith.constant 1.250000e-01 : f32
    %40 = vector.broadcast %cst_7 : f32 to vector<8x256xf32>
    %41 = arith.mulf %39, %40 : vector<8x256xf32>
    %c0_8 = arith.constant 0 : index
    %c256 = arith.constant 256 : index
    %42 = vector.load %arg3[%c0_8, %c256] : memref<8x512xf32, #tpu.memory_space<vmem>>, vector<8x256xf32>
    tpu.vector_store %arg3[%c0_8, %c256], %41 {strides = array<i32>} : memref<8x512xf32, #tpu.memory_space<vmem>>, vector<8x256xf32>,
    %c16_i32_9 = arith.constant 16 : i32
    %43 = tpu.dynamic_rotate %34 by %c16_i32_9 dim 1 : vector<8x256xf32>, i32 -> vector<8x256xf32>
    %44 = arith.select %15, %34, %43 : vector<8x256xi1>, vector<8x256xf32>
    %c240_i32_10 = arith.constant 240 : i32
    %45 = tpu.dynamic_rotate %34 by %c240_i32_10 dim 1 : vector<8x256xf32>, i32 -> vector<8x256xf32>
    %46 = arith.select %21, %34, %45 : vector<8x256xi1>, vector<8x256xf32>
    %cst_11 = arith.constant 2.000000e+00 : f32
    %47 = vector.broadcast %cst_11 : f32 to vector<8x256xf32>
    %48 = arith.mulf %47, %34 : vector<8x256xf32>
    %49 = arith.addf %44, %48 : vector<8x256xf32>
    %50 = arith.addf %49, %46 : vector<8x256xf32>
    %cst_12 = arith.constant 1.250000e-01 : f32
    %51 = vector.broadcast %cst_12 : f32 to vector<8x256xf32>
    %52 = arith.mulf %50, %51 : vector<8x256xf32>
    %c0_13 = arith.constant 0 : index
    %c0_14 = arith.constant 0 : index
    %53 = vector.load %arg3[%c0_13, %c0_14] : memref<8x512xf32, #tpu.memory_space<vmem>>, vector<8x256xf32>
    tpu.vector_store %arg3[%c0_13, %c0_14], %52 {strides = array<i32>} : memref<8x512xf32, #tpu.memory_space<vmem>>, vector<8x256xf32>,
    return
  }
  func.func @transform_0(%arg0: i32) -> (i32, i32) {
    %c0_i32 = arith.constant 0 : i32
    %c0_i32_0 = arith.constant 0 : i32
    %c0_i32_1 = arith.constant 0 : i32
    return %c0_i32, %c0_i32_0 : i32, i32
  }
  func.func @transform_1(%arg0: i32) -> (i32, i32) {
    %c0_i32 = arith.constant 0 : i32
    %c0_i32_0 = arith.constant 0 : i32
    return %arg0, %c0_i32 : i32, i32
  }
  func.func @transform_2(%arg0: i32) -> (i32, i32) {
    %c0_i32 = arith.constant 0 : i32
    %c0_i32_0 = arith.constant 0 : i32
    return %arg0, %c0_i32 : i32, i32
  }
}

</mosaic_0001>

<llo_original>
// kernel: tpu_custom_call.1
$region0: #{tpu_custom_call.1}
  #allocation0 [shape = 'u32[]', space=smem, size = 0x4, offset = 0x4, fixed_abs, tag = 'smem constant byte address 0x4 - core index']
  #allocation1 [shape = 'u32[72,128]{1,0:T(1,128)}', space=vmem, size = 0x9000, scoped, tag = 'internal scratch']
  %s0 = inlined_call_operand.hbm [shape: s32[1,256], index: 0, kind: input, shape index: {}]
  %s1 = inlined_call_operand.hbm [shape: f32[8,256], index: 1, kind: input, shape index: {}]
  %s2 = inlined_call_operand.hbm [shape: f32[8,512], index: 2, kind: output, shape index: {}]
  %s3 = sld [smem:[#allocation0]]
  $region26: #{tpu_custom_call.1} parent=0
    _
  %s5 = ssub.s32 1, %s3
  %s6 = scalar_select 0, %s5, %s3
  $region1: #{tpu_custom_call.1} parent=0
    #allocation2 [shape = 'u8[1024]{0}', space=vmem, size = 0x400, scoped, tag = 'input window, operand 0, single buffered']
    #allocation3 [shape = 's32[1]{0}', space=sflag, size = 0x4, scoped, tag = 'scoped memory for tpu_custom_call.1']
    #allocation4 [shape = 's32[1]{0}', space=sflag, size = 0x4, scoped, tag = 'scoped memory for tpu_custom_call.1']
    #allocation5 [shape = 'u8[8192]{0}', space=vmem, size = 0x2000, scoped, tag = 'input window, operand 1, single buffered']
    #allocation6 [shape = 's32[1]{0}', space=sflag, size = 0x4, scoped, tag = 'scoped memory for tpu_custom_call.1']
    #allocation7 [shape = 'u8[16384]{0}', space=vmem, size = 0x4000, scoped, tag = 'output window, operand 0, single buffered']
    %7 = vsyncpa [#allocation3], 0
    %8 = vsyncpa [#allocation6], 0
    %9 = vsyncpa [#allocation4], 0
    // Predicated region
    $region2: #{tpu_custom_call.1} parent=1 // pred_check
      _
    $region3: #{tpu_custom_call.1} parent=1 // pred_check_branch
      %11 = sbr.rel (0) target = $region5
    $region4: #{tpu_custom_call.1} parent=1 // pred_region
      %13 = vsyncadd [#allocation3], 0
      %s15 = sshll.u32 %s0, 4
      %s16 = int_to_ptr.hbm [resolvable:$true] %s15
      %s17 = sshll.u32 [#allocation2], 4
      %s18 = int_to_ptr.vmem [resolvable:$true] %s17
      %20 = dma.hbm_to_vmem [thread:$0]  %s16, 32, %s18, [#allocation3]
    $region5: #{tpu_custom_call.1} parent=1 // pred_fallthru
      _
    // Predicated region
    $region6: #{tpu_custom_call.1} parent=1 // pred_check
      _
    $region7: #{tpu_custom_call.1} parent=1 // pred_check_branch
      %22 = sbr.rel (0) target = $region9
    $region8: #{tpu_custom_call.1} parent=1 // pred_region
      %24 = vsyncadd [#allocation6], 0
      %s26 = sshll.u32 %s1, 4
      %s27 = int_to_ptr.hbm [resolvable:$true] %s26
      %s28 = sshll.u32 [#allocation5], 4
      %s29 = int_to_ptr.vmem [resolvable:$true] %s28
      %31 = dma.hbm_to_vmem [thread:$0]  %s27, 256, %s29, [#allocation6]
    $region9: #{tpu_custom_call.1} parent=1 // pred_fallthru
      _
    // Predicated region
    $region10: #{tpu_custom_call.1} parent=1 // pred_check
      _
    $region11: #{tpu_custom_call.1} parent=1 // pred_check_branch
      %33 = sbr.rel (0) target = $region13
    $region12: #{tpu_custom_call.1} parent=1 // pred_region
      %35 = dma.done [#allocation3], 32
    $region13: #{tpu_custom_call.1} parent=1 // pred_fallthru
      _
    // Predicated region
    $region14: #{tpu_custom_call.1} parent=1 // pred_check
      _
    $region15: #{tpu_custom_call.1} parent=1 // pred_check_branch
      %37 = sbr.rel (0) target = $region17
    $region16: #{tpu_custom_call.1} parent=1 // pred_region
      %39 = dma.done [#allocation6], 256
    $region17: #{tpu_custom_call.1} parent=1 // pred_fallthru
      _
    %v40 = vld [vmem:[#allocation5] sm:$0xff]
    %v41 = vld [vmem:[#allocation5 + $0x8] sm:$0xff]
    %v42 = vld [vmem:[#allocation2] sm:$0x3]
    %v43 = vand.u32 %v42, 1
    %vm44 = vcmp.ne.s32.totalorder %v43, 0
    %v45 = vand.u32 %v42, 2
    %vm46 = vcmp.ne.s32.totalorder %v45, 0
    %v47 = vand.u32 %v42, 4
    %vm48 = vcmp.ne.s32.totalorder %v47, 0
    %v49 = vsel %vm48, 1, 0
    %v50 = vperm.slane %v49, 0
    %v51 = vperm.slane %v49, 1
    %vm52 = vcmp.eq.s32.totalorder %v50, 1
    %vm53 = vcmp.eq.s32.totalorder %v51, 1
    %v54 = vand.u32 %v42, 8
    %vm55 = vcmp.ne.s32.totalorder %v54, 0
    %v56 = vsel %vm55, 1, 0
    %v57 = vperm.slane %v56, 0
    %v58 = vperm.slane %v56, 1
    %vm59 = vcmp.eq.s32.totalorder %v57, 1
    %vm60 = vcmp.eq.s32.totalorder %v58, 1
    %61 = vrot.lane.b32.xlu0 %v40, 127
    %v62 = vpop.permute.xlu0 %61
    %63 = vrot.lane.b32.xlu0 %v41, 127
    %v64 = vpop.permute.xlu0 %63
    %v65 = vlaneseq
    %v66 = vand.u32 %v65, 127
    %vm67 = vcmp.lt.s32.totalorder %v66, 127
    %v68 = vsel %vm67, %v62, %v64
    %v69 = vsel %vm67, %v64, %v62
    %v70 = vsel %vm46, 1, 0
    %v71 = vperm.slane %v70, 0
    %v72 = vperm.slane %v70, 1
    %vm73 = vcmp.eq.s32.totalorder %v71, 1
    %vm74 = vcmp.eq.s32.totalorder %v72, 1
    %v75 = vsel %vm73, %v40, %v68
    %v76 = vsel %vm74, %v41, %v69
    %77 = vrot.lane.b32.xlu0 %v40, 1
    %v78 = vpop.permute.xlu0 %77
    %79 = vrot.lane.b32.xlu0 %v41, 1
    %v80 = vpop.permute.xlu0 %79
    %vm81 = vcmp.lt.s32.totalorder %v66, 1
    %v82 = vsel %vm81, %v78, %v80
    %v83 = vsel %vm81, %v80, %v78
    %v84 = vsel %vm44, 1, 0
    %v85 = vperm.slane %v84, 0
    %v86 = vperm.slane %v84, 1
    %vm87 = vcmp.eq.s32.totalorder %v85, 1
    %vm88 = vcmp.eq.s32.totalorder %v86, 1
    %v89 = vsel %vm87, %v40, %v83
    %v90 = vsel %vm88, %v41, %v82
    %v91 = vmul.f32 %v40, 2.0
    %v92 = vmul.f32 %v41, 2.0
    %v93 = vadd.f32 %v89, %v91
    %v94 = vadd.f32 %v90, %v92
    %v95 = vadd.f32 %v93, %v75
    %v96 = vadd.f32 %v94, %v76
    %v97 = vsub.f32 %v75, %v89
    %v98 = vsub.f32 %v76, %v90
    %99 = vrot.lane.b32.xlu0 %v95, 16
    %v100 = vpop.permute.xlu0 %99
    %101 = vrot.lane.b32.xlu0 %v96, 16
    %v102 = vpop.permute.xlu0 %101
    %vm103 = vcmp.lt.s32.totalorder %v66, 16
    %v104 = vsel %vm103, %v100, %v102
    %v105 = vsel %vm103, %v102, %v100
    %v106 = vsel %vm52, %v95, %v105
    %v107 = vsel %vm53, %v96, %v104
    %108 = vrot.lane.b32.xlu0 %v95, 112
    %v109 = vpop.permute.xlu0 %108
    %110 = vrot.lane.b32.xlu0 %v96, 112
    %v111 = vpop.permute.xlu0 %110
    %vm112 = vcmp.lt.s32.totalorder %v66, 112
    %v113 = vsel %vm112, %v109, %v111
    %v114 = vsel %vm112, %v111, %v109
    %v115 = vsel %vm59, %v95, %v113
    %v116 = vsel %vm60, %v96, %v114
    %v117 = vsub.f32 %v115, %v106
    %v118 = vsub.f32 %v116, %v107
    %v119 = vmul.f32 %v117, 0.125
    %v120 = vmul.f32 %v118, 0.125
    %121 = vst [vmem:[#allocation7 + $0x10] sm:$0xff] %v119
    %122 = vst [vmem:[#allocation7 + $0x18] sm:$0xff] %v120
    %123 = vrot.lane.b32.xlu0 %v97, 16
    %v124 = vpop.permute.xlu0 %123
    %125 = vrot.lane.b32.xlu0 %v98, 16
    %v126 = vpop.permute.xlu0 %125
    %v127 = vsel %vm103, %v124, %v126
    %v128 = vsel %vm103, %v126, %v124
    %v129 = vsel %vm52, %v97, %v128
    %v130 = vsel %vm53, %v98, %v127
    %131 = vrot.lane.b32.xlu0 %v97, 112
    %v132 = vpop.permute.xlu0 %131
    %133 = vrot.lane.b32.xlu0 %v98, 112
    %v134 = vpop.permute.xlu0 %133
    %v135 = vsel %vm112, %v132, %v134
    %v136 = vsel %vm112, %v134, %v132
    %v137 = vsel %vm59, %v97, %v135
    %v138 = vsel %vm60, %v98, %v136
    %v139 = vmul.f32 %v97, 2.0
    %v140 = vmul.f32 %v98, 2.0
    %v141 = vadd.f32 %v129, %v139
    %v142 = vadd.f32 %v130, %v140
    %v143 = vadd.f32 %v141, %v137
    %v144 = vadd.f32 %v142, %v138
    %v145 = vmul.f32 %v143, 0.125
    %v146 = vmul.f32 %v144, 0.125
    %147 = vst [vmem:[#allocation7] sm:$0xff] %v145
    %148 = vst [vmem:[#allocation7 + $0x8] sm:$0xff] %v146
    // Predicated region
    $region18: #{tpu_custom_call.1} parent=1 // pred_check
      _
    $region19: #{tpu_custom_call.1} parent=1 // pred_check_branch
      %150 = sbr.rel (0) target = $region21
    $region20: #{tpu_custom_call.1} parent=1 // pred_region
      %152 = vsyncadd [#allocation4], 0
      %s154 = sshll.u32 [#allocation7], 4
      %s155 = int_to_ptr.vmem [resolvable:$true] %s154
      %s156 = sshll.u32 %s2, 4
      %s157 = int_to_ptr.hbm [resolvable:$true] %s156
      %159 = dma.vmem_to_hbm [thread:$0]  %s155, 512, %s157, [#allocation4]
    $region21: #{tpu_custom_call.1} parent=1 // pred_fallthru
      _
    // Predicated region
    $region22: #{tpu_custom_call.1} parent=1 // pred_check
      _
    $region23: #{tpu_custom_call.1} parent=1 // pred_check_branch
      %161 = sbr.rel (0) target = $region25
    $region24: #{tpu_custom_call.1} parent=1 // pred_region
      %163 = dma.done [#allocation4], 512
    $region25: #{tpu_custom_call.1} parent=1 // pred_fallthru
      _
    %164 = vsyncpa [#allocation3], 1
    %165 = vsyncpa [#allocation6], 1
    %166 = vsyncpa [#allocation4], 1

</llo_original>
